<compile_context>
chip_gen: v6e
topology: v6e:2x2x1
jax: 0.10.0
libtpu: 0.0.40
codegen_flags: <defaults>
</compile_context>

<pallas_src>
import math

import jax
import jax.numpy as jnp
import numpy as np
from jax import lax
from jax.experimental import pallas as pl
from jax.experimental.pallas import tpu as pltpu


def _gelu_exact(x):
    # PyTorch F.gelu default is the exact erf-based GELU.
    return 0.5 * x * (1.0 + lax.erf(x * (1.0 / math.sqrt(2.0))))


def make_conv_block_kernel(K, dilation, pad, has_projector):
    def write_im2col(stack_ref, h):
        """stack[k*C + c, t] = h_padded[c, t + k*dilation] (zeros outside).

        Shifts along T (the lane axis) use pltpu.roll + a lane mask, so only
        halo positions become zeros -- no full-buffer memset, no unaligned
        lane slices.  Every element of stack_ref is (re)written each call.
        """
        C, T = h.shape
        t_idx = lax.broadcasted_iota(jnp.int32, (C, T), 1)
        for k in range(K):
            s = k * dilation - pad            # source offset: tap[t] = h[t + s]
            r = (-s) % T                      # equivalent circular roll amount
            rolled = pltpu.roll(h, r, axis=1) if r else h
            valid = (t_idx >= -s) & (t_idx < T - s)
            stack_ref[k * C:(k + 1) * C, :] = jnp.where(valid, rolled, 0.0)

    def kernel(*refs):
        if has_projector:
            (x_ref, wp_ref, bp_ref, w1_ref, b1_ref, w2_ref, b2_ref,
             o_ref, stack1, stack2) = refs
        else:
            (x_ref, w1_ref, b1_ref, w2_ref, b2_ref,
             o_ref, stack1, stack2) = refs

        # ---- gelu(x) -> im2col -> conv1 (single MXU matmul) ----
        gx = _gelu_exact(x_ref[...])                        # (Cin, T)
        write_im2col(stack1, gx)
        h1 = jnp.dot(w1_ref[...], stack1[...],
                     preferred_element_type=jnp.float32) + b1_ref[...]
        h1 = _gelu_exact(h1)                                # (Cout, T)

        # ---- im2col -> conv2 (single MXU matmul) ----
        write_im2col(stack2, h1)
        out = jnp.dot(w2_ref[...], stack2[...],
                      preferred_element_type=jnp.float32) + b2_ref[...]

        # ---- residual last (short live range) ----
        if has_projector:
            res = jnp.dot(wp_ref[...], x_ref[...],
                          preferred_element_type=jnp.float32) + bp_ref[...]
        else:
            res = x_ref[...]
        o_ref[...] = (out + res).astype(o_ref.dtype)

    return kernel


def conv_block_forward(x_ncw, params, kernel_size, dilation):
    """x_ncw: (N, Cin, T) float32 (PyTorch NCW). Returns (N, Cout, T)."""
    N, Cin, T = x_ncw.shape
    K = kernel_size
    rf = (K - 1) * dilation + 1
    pad = rf // 2
    # Even receptive fields (the SamePadConv "remove" trim) are handled by only
    # ever computing the first T output positions inside the kernel.

    w1 = params['w1']                                   # (Cout, Cin, K)
    Cout = w1.shape[0]
    has_projector = 'wp' in params
    if not has_projector:
        assert Cin == Cout, "ConvBlock without projector requires Cin == Cout"

    f32 = jnp.float32
    # Flatten taps to match the im2col stack order: w_flat[o, k*C + c] = w[o, c, k]
    w1_flat = jnp.transpose(w1, (0, 2, 1)).reshape(Cout, K * Cin).astype(f32)
    w2_flat = jnp.transpose(params['w2'], (0, 2, 1)).reshape(Cout, K * Cout).astype(f32)
    b1 = params['b1'].reshape(Cout, 1).astype(f32)
    b2 = params['b2'].reshape(Cout, 1).astype(f32)
    x = x_ncw.astype(f32)

    def const_spec(shape):
        # Whole array, same block every grid step -> stays VMEM resident.
        return pl.BlockSpec(shape, lambda n: (0,) * len(shape))

    inputs = [x]
    in_specs = [pl.BlockSpec((None, Cin, T), lambda n: (n, 0, 0))]
    if has_projector:
        wp = params['wp'][:, :, 0].astype(f32)          # (Cout, Cin) 1x1-conv
        bp = params['bp'].reshape(Cout, 1).astype(f32)
        inputs += [wp, bp]
        in_specs += [const_spec(wp.shape), const_spec(bp.shape)]
    inputs += [w1_flat, b1, w2_flat, b2]
    in_specs += [const_spec(w1_flat.shape), const_spec(b1.shape),
                 const_spec(w2_flat.shape), const_spec(b2.shape)]

    kernel = make_conv_block_kernel(K, dilation, pad, has_projector)

    return pl.pallas_call(
        kernel,
        out_shape=jax.ShapeDtypeStruct((N, Cout, T), f32),
        grid=(N,),                                      # one batch element / step
        in_specs=in_specs,
        out_specs=pl.BlockSpec((None, Cout, T), lambda n: (n, 0, 0)),
        scratch_shapes=[
            pltpu.VMEM((K * Cin, T), f32),              # im2col stack for conv1
            pltpu.VMEM((K * Cout, T), f32),             # im2col stack for conv2
        ],
        compiler_params=pltpu.CompilerParams(
            dimension_semantics=("parallel",)),
    )(*inputs)


# ---------------- pure-JAX reference (mirrors the PyTorch module) ------------
def reference_conv_block(x, params, kernel_size, dilation):
    rf = (kernel_size - 1) * dilation + 1
    padv = rf // 2
    remove = 1 if rf % 2 == 0 else 0

    def same_pad_conv(h, w, b):
        out = lax.conv_general_dilated(
            h, w, window_strides=(1,), padding=[(padv, padv)],
            rhs_dilation=(dilation,), dimension_numbers=('NCH', 'OIH', 'NCH'))
        out = out + b[None, :, None]
        if remove:
            out = out[:, :, :-remove]
        return out

    if 'wp' in params:
        residual = lax.conv_general_dilated(
            x, params['wp'], (1,), [(0, 0)],
            dimension_numbers=('NCH', 'OIH', 'NCH')) + params['bp'][None, :, None]
    else:
        residual = x
    h = jax.nn.gelu(x, approximate=False)
    h = same_pad_conv(h, params['w1'], params['b1'])
    h = jax.nn.gelu(h, approximate=False)
    h = same_pad_conv(h, params['w2'], params['b2'])
    return h + residual


if __name__ == "__main__":
    key = jax.random.PRNGKey(0)

    # Case 1: ConvBlock(4, 8, kernel_size=3, dilation=2) -> projector present.
    N, Cin, Cout, T = 2, 4, 8, 16
    K, dilation = 3, 2
    kx, k1, k2, k3, k4, k5, k6, key = jax.random.split(key, 8)
    x = jax.random.normal(kx, (N, Cin, T), dtype=jnp.float32)
    params = {
        'w1': 0.3 * jax.random.normal(k1, (Cout, Cin, K), dtype=jnp.float32),
        'b1': 0.1 * jax.random.normal(k2, (Cout,), dtype=jnp.float32),
        'w2': 0.3 * jax.random.normal(k3, (Cout, Cout, K), dtype=jnp.float32),
        'b2': 0.1 * jax.random.normal(k4, (Cout,), dtype=jnp.float32),
        'wp': 0.3 * jax.random.normal(k5, (Cout, Cin, 1), dtype=jnp.float32),
        'bp': 0.1 * jax.random.normal(k6, (Cout,), dtype=jnp.float32),
    }
    out = jax.block_until_ready(conv_block_forward(x, params, K, dilation))
    ref = jax.block_until_ready(reference_conv_block(x, params, K, dilation))
    np.testing.assert_allclose(np.asarray(out), np.asarray(ref),
                               rtol=1e-5, atol=1e-5)

    # Case 2: ConvBlock(8, 8, kernel_size=2, dilation=1) -> no projector and an
    # even receptive field (exercises the "remove" trim path).
    N2, C2, T2, K2, d2 = 2, 8, 16, 2, 1
    kx2, k1b, k2b, k3b, k4b = jax.random.split(key, 5)
    x2 = jax.random.normal(kx2, (N2, C2, T2), dtype=jnp.float32)
    params2 = {
        'w1': 0.3 * jax.random.normal(k1b, (C2, C2, K2), dtype=jnp.float32),
        'b1': 0.1 * jax.random.normal(k2b, (C2,), dtype=jnp.float32),
        'w2': 0.3 * jax.random.normal(k3b, (C2, C2, K2), dtype=jnp.float32),
        'b2': 0.1 * jax.random.normal(k4b, (C2,), dtype=jnp.float32),
    }
    out2 = jax.block_until_ready(conv_block_forward(x2, params2, K2, d2))
    ref2 = jax.block_until_ready(reference_conv_block(x2, params2, K2, d2))
    np.testing.assert_allclose(np.asarray(out2), np.asarray(ref2),
                               rtol=1e-5, atol=1e-5)

    print("KERNEL_OK")
</pallas_src>

<mosaic_0001>
module attributes {stable_mosaic.version = 11 : i64} {
  func.func @kernel(%arg0: i32, %arg1: memref<1x4x16xf32, #tpu.memory_space<vmem>>, %arg2: memref<8x4xf32, #tpu.memory_space<vmem>>, %arg3: memref<8x1xf32, #tpu.memory_space<vmem>>, %arg4: memref<8x12xf32, #tpu.memory_space<vmem>>, %arg5: memref<8x1xf32, #tpu.memory_space<vmem>>, %arg6: memref<8x24xf32, #tpu.memory_space<vmem>>, %arg7: memref<8x1xf32, #tpu.memory_space<vmem>>, %arg8: memref<1x8x16xf32, #tpu.memory_space<vmem>>, %arg9: memref<12x16xf32, #tpu.memory_space<vmem>>, %arg10: memref<24x16xf32, #tpu.memory_space<vmem>>) attributes {dimension_semantics = [#tpu.dimension_semantics<parallel>], iteration_bounds = array<i64: 2>, scalar_prefetch = 0 : i64, scratch_operands = 2 : i64, tpu.core_type = #tpu.core_type<tc>, window_params = [{transform_indices = @transform_0, window_bounds = array<i64: 1, 4, 16>}, {pipeline_mode = #tpu.pipeline_mode<synchronous>, transform_indices = @transform_1, window_bounds = array<i64: 8, 4>}, {pipeline_mode = #tpu.pipeline_mode<synchronous>, transform_indices = @transform_2, window_bounds = array<i64: 8, 1>}, {pipeline_mode = #tpu.pipeline_mode<synchronous>, transform_indices = @transform_3, window_bounds = array<i64: 8, 12>}, {pipeline_mode = #tpu.pipeline_mode<synchronous>, transform_indices = @transform_4, window_bounds = array<i64: 8, 1>}, {pipeline_mode = #tpu.pipeline_mode<synchronous>, transform_indices = @transform_5, window_bounds = array<i64: 8, 24>}, {pipeline_mode = #tpu.pipeline_mode<synchronous>, transform_indices = @transform_6, window_bounds = array<i64: 8, 1>}, {transform_indices = @transform_7, window_bounds = array<i64: 1, 8, 16>}]} {
    %c0 = arith.constant 0 : index
    %c0_0 = arith.constant 0 : index
    %c0_1 = arith.constant 0 : index
    %0 = vector.load %arg1[%c0, %c0_0, %c0_1] : memref<1x4x16xf32, #tpu.memory_space<vmem>>, vector<1x4x16xf32>
    %1 = vector.shape_cast %0 : vector<1x4x16xf32> to vector<4x16xf32>
    %cst = arith.constant 5.000000e-01 : f32
    %2 = vector.broadcast %cst : f32 to vector<4x16xf32>
    %3 = arith.mulf %2, %1 : vector<4x16xf32>
    %cst_2 = arith.constant 0.707106769 : f32
    %4 = vector.broadcast %cst_2 : f32 to vector<4x16xf32>
    %5 = arith.mulf %1, %4 : vector<4x16xf32>
    %6 = math.erf %5 : vector<4x16xf32>
    %cst_3 = arith.constant 1.000000e+00 : f32
    %7 = vector.broadcast %cst_3 : f32 to vector<4x16xf32>
    %8 = arith.addf %7, %6 : vector<4x16xf32>
    %9 = arith.mulf %3, %8 : vector<4x16xf32>
    %10 = tpu.iota {dimensions = array<i32: 1>} : vector<4x16xi32>
    %c2_i32 = arith.constant 2 : i32
    %11 = tpu.dynamic_rotate %9 by %c2_i32 dim 1 : vector<4x16xf32>, i32 -> vector<4x16xf32>
    %c2_i32_4 = arith.constant 2 : i32
    %12 = vector.broadcast %c2_i32_4 : i32 to vector<4x16xi32>
    %13 = arith.cmpi sge, %10, %12 : vector<4x16xi32>
    %c18_i32 = arith.constant 18 : i32
    %14 = vector.broadcast %c18_i32 : i32 to vector<4x16xi32>
    %15 = arith.cmpi slt, %10, %14 : vector<4x16xi32>
    %16 = arith.andi %13, %15 : vector<4x16xi1>
    %cst_5 = arith.constant 0.000000e+00 : f32
    %17 = vector.broadcast %cst_5 : f32 to vector<4x16xf32>
    %18 = arith.select %16, %11, %17 : vector<4x16xi1>, vector<4x16xf32>
    %c0_6 = arith.constant 0 : index
    %c0_7 = arith.constant 0 : index
    %19 = vector.load %arg9[%c0_6, %c0_7] : memref<12x16xf32, #tpu.memory_space<vmem>>, vector<4x16xf32>
    tpu.vector_store %arg9[%c0_6, %c0_7], %18 {strides = array<i32>} : memref<12x16xf32, #tpu.memory_space<vmem>>, vector<4x16xf32>,
    %c0_i32 = arith.constant 0 : i32
    %20 = vector.broadcast %c0_i32 : i32 to vector<4x16xi32>
    %21 = arith.cmpi sge, %10, %20 : vector<4x16xi32>
    %c16_i32 = arith.constant 16 : i32
    %22 = vector.broadcast %c16_i32 : i32 to vector<4x16xi32>
    %23 = arith.cmpi slt, %10, %22 : vector<4x16xi32>
    %24 = arith.andi %21, %23 : vector<4x16xi1>
    %cst_8 = arith.constant 0.000000e+00 : f32
    %25 = vector.broadcast %cst_8 : f32 to vector<4x16xf32>
    %26 = arith.select %24, %9, %25 : vector<4x16xi1>, vector<4x16xf32>
    %c4 = arith.constant 4 : index
    %c0_9 = arith.constant 0 : index
    %27 = vector.load %arg9[%c4, %c0_9] : memref<12x16xf32, #tpu.memory_space<vmem>>, vector<4x16xf32>
    tpu.vector_store %arg9[%c4, %c0_9], %26 {strides = array<i32>} : memref<12x16xf32, #tpu.memory_space<vmem>>, vector<4x16xf32>,
    %c14_i32 = arith.constant 14 : i32
    %28 = tpu.dynamic_rotate %9 by %c14_i32 dim 1 : vector<4x16xf32>, i32 -> vector<4x16xf32>
    %c-2_i32 = arith.constant -2 : i32
    %29 = vector.broadcast %c-2_i32 : i32 to vector<4x16xi32>
    %30 = arith.cmpi sge, %10, %29 : vector<4x16xi32>
    %c14_i32_10 = arith.constant 14 : i32
    %31 = vector.broadcast %c14_i32_10 : i32 to vector<4x16xi32>
    %32 = arith.cmpi slt, %10, %31 : vector<4x16xi32>
    %33 = arith.andi %30, %32 : vector<4x16xi1>
    %cst_11 = arith.constant 0.000000e+00 : f32
    %34 = vector.broadcast %cst_11 : f32 to vector<4x16xf32>
    %35 = arith.select %33, %28, %34 : vector<4x16xi1>, vector<4x16xf32>
    %c8 = arith.constant 8 : index
    %c0_12 = arith.constant 0 : index
    %36 = vector.load %arg9[%c8, %c0_12] : memref<12x16xf32, #tpu.memory_space<vmem>>, vector<4x16xf32>
    tpu.vector_store %arg9[%c8, %c0_12], %35 {strides = array<i32>} : memref<12x16xf32, #tpu.memory_space<vmem>>, vector<4x16xf32>,
    %c0_13 = arith.constant 0 : index
    %c0_14 = arith.constant 0 : index
    %37 = vector.load %arg4[%c0_13, %c0_14] : memref<8x12xf32, #tpu.memory_space<vmem>>, vector<8x12xf32>
    %c0_15 = arith.constant 0 : index
    %c0_16 = arith.constant 0 : index
    %38 = vector.load %arg9[%c0_15, %c0_16] : memref<12x16xf32, #tpu.memory_space<vmem>>, vector<12x16xf32>
    %cst_17 = arith.constant dense<0.000000e+00> : vector<8x16xf32>
    %39 = tpu.matmul %37, %38, %cst_17 {dimension_numbers = #tpu.dot_dimension_numbers<[1], [0], [0], [1], [0, 0, 1, 1], [], []>} : vector<8x12xf32>, vector<12x16xf32>, vector<8x16xf32> -> vector<8x16xf32>
    %c0_18 = arith.constant 0 : index
    %c0_19 = arith.constant 0 : index
    %40 = vector.load %arg5[%c0_18, %c0_19] : memref<8x1xf32, #tpu.memory_space<vmem>>, vector<8x1xf32>
    %41 = vector.broadcast %40 : vector<8x1xf32> to vector<8x16xf32>
    %42 = arith.addf %39, %41 : vector<8x16xf32>
    %cst_20 = arith.constant 5.000000e-01 : f32
    %43 = vector.broadcast %cst_20 : f32 to vector<8x16xf32>
    %44 = arith.mulf %43, %42 : vector<8x16xf32>
    %cst_21 = arith.constant 0.707106769 : f32
    %45 = vector.broadcast %cst_21 : f32 to vector<8x16xf32>
    %46 = arith.mulf %42, %45 : vector<8x16xf32>
    %47 = math.erf %46 : vector<8x16xf32>
    %cst_22 = arith.constant 1.000000e+00 : f32
    %48 = vector.broadcast %cst_22 : f32 to vector<8x16xf32>
    %49 = arith.addf %48, %47 : vector<8x16xf32>
    %50 = arith.mulf %44, %49 : vector<8x16xf32>
    %51 = tpu.iota {dimensions = array<i32: 1>} : vector<8x16xi32>
    %c2_i32_23 = arith.constant 2 : i32
    %52 = tpu.dynamic_rotate %50 by %c2_i32_23 dim 1 : vector<8x16xf32>, i32 -> vector<8x16xf32>
    %c2_i32_24 = arith.constant 2 : i32
    %53 = vector.broadcast %c2_i32_24 : i32 to vector<8x16xi32>
    %54 = arith.cmpi sge, %51, %53 : vector<8x16xi32>
    %c18_i32_25 = arith.constant 18 : i32
    %55 = vector.broadcast %c18_i32_25 : i32 to vector<8x16xi32>
    %56 = arith.cmpi slt, %51, %55 : vector<8x16xi32>
    %57 = arith.andi %54, %56 : vector<8x16xi1>
    %cst_26 = arith.constant 0.000000e+00 : f32
    %58 = vector.broadcast %cst_26 : f32 to vector<8x16xf32>
    %59 = arith.select %57, %52, %58 : vector<8x16xi1>, vector<8x16xf32>
    %c0_27 = arith.constant 0 : index
    %c0_28 = arith.constant 0 : index
    %60 = vector.load %arg10[%c0_27, %c0_28] : memref<24x16xf32, #tpu.memory_space<vmem>>, vector<8x16xf32>
    tpu.vector_store %arg10[%c0_27, %c0_28], %59 {strides = array<i32>} : memref<24x16xf32, #tpu.memory_space<vmem>>, vector<8x16xf32>,
    %c0_i32_29 = arith.constant 0 : i32
    %61 = vector.broadcast %c0_i32_29 : i32 to vector<8x16xi32>
    %62 = arith.cmpi sge, %51, %61 : vector<8x16xi32>
    %c16_i32_30 = arith.constant 16 : i32
    %63 = vector.broadcast %c16_i32_30 : i32 to vector<8x16xi32>
    %64 = arith.cmpi slt, %51, %63 : vector<8x16xi32>
    %65 = arith.andi %62, %64 : vector<8x16xi1>
    %cst_31 = arith.constant 0.000000e+00 : f32
    %66 = vector.broadcast %cst_31 : f32 to vector<8x16xf32>
    %67 = arith.select %65, %50, %66 : vector<8x16xi1>, vector<8x16xf32>
    %c8_32 = arith.constant 8 : index
    %c0_33 = arith.constant 0 : index
    %68 = vector.load %arg10[%c8_32, %c0_33] : memref<24x16xf32, #tpu.memory_space<vmem>>, vector<8x16xf32>
    tpu.vector_store %arg10[%c8_32, %c0_33], %67 {strides = array<i32>} : memref<24x16xf32, #tpu.memory_space<vmem>>, vector<8x16xf32>,
    %c14_i32_34 = arith.constant 14 : i32
    %69 = tpu.dynamic_rotate %50 by %c14_i32_34 dim 1 : vector<8x16xf32>, i32 -> vector<8x16xf32>
    %c-2_i32_35 = arith.constant -2 : i32
    %70 = vector.broadcast %c-2_i32_35 : i32 to vector<8x16xi32>
    %71 = arith.cmpi sge, %51, %70 : vector<8x16xi32>
    %c14_i32_36 = arith.constant 14 : i32
    %72 = vector.broadcast %c14_i32_36 : i32 to vector<8x16xi32>
    %73 = arith.cmpi slt, %51, %72 : vector<8x16xi32>
    %74 = arith.andi %71, %73 : vector<8x16xi1>
    %cst_37 = arith.constant 0.000000e+00 : f32
    %75 = vector.broadcast %cst_37 : f32 to vector<8x16xf32>
    %76 = arith.select %74, %69, %75 : vector<8x16xi1>, vector<8x16xf32>
    %c16 = arith.constant 16 : index
    %c0_38 = arith.constant 0 : index
    %77 = vector.load %arg10[%c16, %c0_38] : memref<24x16xf32, #tpu.memory_space<vmem>>, vector<8x16xf32>
    tpu.vector_store %arg10[%c16, %c0_38], %76 {strides = array<i32>} : memref<24x16xf32, #tpu.memory_space<vmem>>, vector<8x16xf32>,
    %c0_39 = arith.constant 0 : index
    %c0_40 = arith.constant 0 : index
    %78 = vector.load %arg6[%c0_39, %c0_40] : memref<8x24xf32, #tpu.memory_space<vmem>>, vector<8x24xf32>
    %c0_41 = arith.constant 0 : index
    %c0_42 = arith.constant 0 : index
    %79 = vector.load %arg10[%c0_41, %c0_42] : memref<24x16xf32, #tpu.memory_space<vmem>>, vector<24x16xf32>
    %cst_43 = arith.constant dense<0.000000e+00> : vector<8x16xf32>
    %80 = tpu.matmul %78, %79, %cst_43 {dimension_numbers = #tpu.dot_dimension_numbers<[1], [0], [0], [1], [0, 0, 1, 1], [], []>} : vector<8x24xf32>, vector<24x16xf32>, vector<8x16xf32> -> vector<8x16xf32>
    %c0_44 = arith.constant 0 : index
    %c0_45 = arith.constant 0 : index
    %81 = vector.load %arg7[%c0_44, %c0_45] : memref<8x1xf32, #tpu.memory_space<vmem>>, vector<8x1xf32>
    %82 = vector.broadcast %81 : vector<8x1xf32> to vector<8x16xf32>
    %83 = arith.addf %80, %82 : vector<8x16xf32>
    %c0_46 = arith.constant 0 : index
    %c0_47 = arith.constant 0 : index
    %84 = vector.load %arg2[%c0_46, %c0_47] : memref<8x4xf32, #tpu.memory_space<vmem>>, vector<8x4xf32>
    %c0_48 = arith.constant 0 : index
    %c0_49 = arith.constant 0 : index
    %c0_50 = arith.constant 0 : index
    %85 = vector.load %arg1[%c0_48, %c0_49, %c0_50] : memref<1x4x16xf32, #tpu.memory_space<vmem>>, vector<1x4x16xf32>
    %86 = vector.shape_cast %85 : vector<1x4x16xf32> to vector<4x16xf32>
    %cst_51 = arith.constant dense<0.000000e+00> : vector<8x16xf32>
    %87 = tpu.matmul %84, %86, %cst_51 {dimension_numbers = #tpu.dot_dimension_numbers<[1], [0], [0], [1], [0, 0, 1, 1], [], []>} : vector<8x4xf32>, vector<4x16xf32>, vector<8x16xf32> -> vector<8x16xf32>
    %c0_52 = arith.constant 0 : index
    %c0_53 = arith.constant 0 : index
    %88 = vector.load %arg3[%c0_52, %c0_53] : memref<8x1xf32, #tpu.memory_space<vmem>>, vector<8x1xf32>
    %89 = vector.broadcast %88 : vector<8x1xf32> to vector<8x16xf32>
    %90 = arith.addf %87, %89 : vector<8x16xf32>
    %91 = arith.addf %83, %90 : vector<8x16xf32>
    %c0_54 = arith.constant 0 : index
    %c0_55 = arith.constant 0 : index
    %c0_56 = arith.constant 0 : index
    %92 = vector.load %arg8[%c0_54, %c0_55, %c0_56] : memref<1x8x16xf32, #tpu.memory_space<vmem>>, vector<1x8x16xf32>
    %93 = vector.shape_cast %92 : vector<1x8x16xf32> to vector<8x16xf32>
    %94 = vector.shape_cast %91 : vector<8x16xf32> to vector<1x8x16xf32>
    tpu.vector_store %arg8[%c0_54, %c0_55, %c0_56], %94 {strides = array<i32>} : memref<1x8x16xf32, #tpu.memory_space<vmem>>, vector<1x8x16xf32>,
    return
  }
  func.func @transform_0(%arg0: i32) -> (i32, i32, i32) {
    %c0_i32 = arith.constant 0 : i32
    %c0_i32_0 = arith.constant 0 : i32
    %c0_i32_1 = arith.constant 0 : i32
    return %arg0, %c0_i32, %c0_i32_0 : i32, i32, i32
  }
  func.func @transform_1(%arg0: i32) -> (i32, i32) {
    %c0_i32 = arith.constant 0 : i32
    %c0_i32_0 = arith.constant 0 : i32
    %c0_i32_1 = arith.constant 0 : i32
    return %c0_i32, %c0_i32_0 : i32, i32
  }
  func.func @transform_2(%arg0: i32) -> (i32, i32) {
    %c0_i32 = arith.constant 0 : i32
    %c0_i32_0 = arith.constant 0 : i32
    %c0_i32_1 = arith.constant 0 : i32
    return %c0_i32, %c0_i32_0 : i32, i32
  }
  func.func @transform_3(%arg0: i32) -> (i32, i32) {
    %c0_i32 = arith.constant 0 : i32
    %c0_i32_0 = arith.constant 0 : i32
    %c0_i32_1 = arith.constant 0 : i32
    return %c0_i32, %c0_i32_0 : i32, i32
  }
  func.func @transform_4(%arg0: i32) -> (i32, i32) {
    %c0_i32 = arith.constant 0 : i32
    %c0_i32_0 = arith.constant 0 : i32
    %c0_i32_1 = arith.constant 0 : i32
    return %c0_i32, %c0_i32_0 : i32, i32
  }
  func.func @transform_5(%arg0: i32) -> (i32, i32) {
    %c0_i32 = arith.constant 0 : i32
    %c0_i32_0 = arith.constant 0 : i32
    %c0_i32_1 = arith.constant 0 : i32
    return %c0_i32, %c0_i32_0 : i32, i32
  }
  func.func @transform_6(%arg0: i32) -> (i32, i32) {
    %c0_i32 = arith.constant 0 : i32
    %c0_i32_0 = arith.constant 0 : i32
    %c0_i32_1 = arith.constant 0 : i32
    return %c0_i32, %c0_i32_0 : i32, i32
  }
  func.func @transform_7(%arg0: i32) -> (i32, i32, i32) {
    %c0_i32 = arith.constant 0 : i32
    %c0_i32_0 = arith.constant 0 : i32
    %c0_i32_1 = arith.constant 0 : i32
    return %arg0, %c0_i32, %c0_i32_0 : i32, i32, i32
  }
}

</mosaic_0001>

<llo_original>
// kernel: tpu_custom_call.1
$region0: #{tpu_custom_call.1}
  #allocation0 [shape = 'u32[]', space=smem, size = 0x4, offset = 0x4, fixed_abs, tag = 'smem constant byte address 0x4 - core index']
  #allocation1 [shape = 'u32[144,128]{1,0:T(1,128)}', space=vmem, size = 0x12000, scoped, tag = 'internal scratch']
  #allocation2 [shape = 'f32[12,16]{1,0:T(8,128)}', space=vmem, size = 0x2000, scoped, tag = 'scratch operand']
  #allocation3 [shape = 'f32[24,16]{1,0:T(8,128)}', space=vmem, size = 0x3000, scoped, tag = 'scratch operand']
  %s0 = inlined_call_operand.vmem [shape: f32[2,4,16], index: 0, kind: input, shape index: {}]
  %s1 = inlined_call_operand.vmem [shape: f32[8,4], index: 1, kind: input, shape index: {}]
  %s2 = inlined_call_operand.vmem [shape: f32[8,1], index: 2, kind: input, shape index: {}]
  %s3 = inlined_call_operand.vmem [shape: f32[8,12], index: 3, kind: input, shape index: {}]
  %s4 = inlined_call_operand.vmem [shape: f32[8,1], index: 4, kind: input, shape index: {}]
  %s5 = inlined_call_operand.vmem [shape: f32[8,24], index: 5, kind: input, shape index: {}]
  %s6 = inlined_call_operand.vmem [shape: f32[8,1], index: 6, kind: input, shape index: {}]
  %s7 = inlined_call_operand.hbm [shape: f32[2,8,16], index: 7, kind: output, shape index: {}]
  %s8 = sld [smem:[#allocation0]]
  $region61: #{tpu_custom_call.1} parent=0
    _
  %s10 = ssub.s32 1, %s8
  %s11 = scalar_select 0, %s10, %s8
  $region1: #{tpu_custom_call.1} parent=0
    #allocation4 [shape = 'u8[8192]{0}', space=vmem, size = 0x2000, scoped, tag = 'output window, operand 0']
    #allocation5 [shape = 's32[2]{0}', space=sflag, size = 0x8, scoped, tag = 'scoped memory for tpu_custom_call.1']
    %12 = vsyncpa [#allocation5], 0
    %s13 = scalar_lea.sflag [#allocation5], 1
    %14 = vsyncpa %s13, 0
    loop: start=0, step=1, limit=4
    $region2: #{tpu_custom_call.1} parent=1 // loop_pre_header
      _
    $region3: #{tpu_custom_call.1} parent=1 // loop_header
      %s16 = sphi 0, %s20
      %p17 = scmp.ge.s32.totalorder %s16, 4
      %s26 = sphi 0, %s28
      %s29 = sphi 0, %s26
      %s30 = sphi 0, %s29
      %s46 = sphi 0, %s30
      %s50 = sphi 0, %s50
      %s52 = sphi 0, %s50
      %s53 = sphi 0, %s52
      %s67 = sphi 0, %s53
      %s71 = sphi 0, %s71
      %s73 = sphi 0, %s71
      %s74 = sphi 0, %s73
      %s88 = sphi 0, %s74
      %s92 = sphi 0, %s92
      %s94 = sphi 0, %s92
      %s95 = sphi 0, %s94
      %s109 = sphi 0, %s95
      %s113 = sphi 0, %s113
      %s115 = sphi 0, %s113
      %s116 = sphi 0, %s115
      %s130 = sphi 0, %s116
      %s134 = sphi 0, %s134
      %s136 = sphi 0, %s134
      %s137 = sphi 0, %s136
      %s151 = sphi 0, %s137
      %s155 = sphi 0, %s155
      %s157 = sphi 0, %s155
      %s158 = sphi 0, %s157
      %s172 = sphi 0, %s158
      %s178 = sphi 0, %s180
      %s181 = sphi 0, %s178
      %s182 = sphi 0, %s181
      %s198 = sphi 0, %s182
    $region4: #{tpu_custom_call.1} parent=1 // loop_header_branch
      %19 = sbr.rel (%p17) target = $region8
    $region5: #{tpu_custom_call.1} parent=1 // loop_body
      %s21 = ssub.s32 %s16, 1
      %s22 = ssub.s32 %s16, 2
      %s23 = sadd.s32 %s16, 1
      %s24 = ssub.s32 %s16, %s23
      %p25 = scmp.eq.s32.totalorder %s24, 0
      %s27 = sadd.s32 %s26, 1
      %s28 = scalar_select %p25, %s26, %s27
      %p31 = pneg %p25
      %p32 = scmp.eq.s32.totalorder %s16, 1
      %p33 = por %p31, %p32
      %p34 = scmp.ne.s32.totalorder %s26, %s29
      %p35 = scmp.eq.s32.totalorder %s16, 0
      %p36 = por %p34, %p35
      %p37 = scmp.ne.s32.totalorder %s26, %s29
      %p38 = scmp.eq.s32.totalorder %s21, 1
      %p39 = por %p37, %p38
      %p40 = scmp.ne.s32.totalorder %s29, %s30
      %p41 = scmp.eq.s32.totalorder %s21, 0
      %p42 = por %p40, %p41
      %p43 = scmp.ne.s32.totalorder %s29, %s30
      %p44 = scmp.eq.s32.totalorder %s22, 1
      %p45 = por %p43, %p44
      %p47 = scmp.ne.s32.totalorder %s30, %s46
      %p48 = scmp.eq.s32.totalorder %s22, 0
      %p49 = por %p47, %p48
      %s51 = sadd.s32 %s50, 1
      %p54 = scmp.eq.s32.totalorder %s16, 1
      %p55 = scmp.ne.s32.totalorder %s50, %s52
      %p56 = scmp.eq.s32.totalorder %s16, 0
      %p57 = por %p55, %p56
      %p58 = scmp.ne.s32.totalorder %s50, %s52
      %p59 = scmp.eq.s32.totalorder %s21, 1
      %p60 = por %p58, %p59
      %p61 = scmp.ne.s32.totalorder %s52, %s53
      %p62 = scmp.eq.s32.totalorder %s21, 0
      %p63 = por %p61, %p62
      %p64 = scmp.ne.s32.totalorder %s52, %s53
      %p65 = scmp.eq.s32.totalorder %s22, 1
      %p66 = por %p64, %p65
      %p68 = scmp.ne.s32.totalorder %s53, %s67
      %p69 = scmp.eq.s32.totalorder %s22, 0
      %p70 = por %p68, %p69
      %s72 = sadd.s32 %s71, 1
      %p75 = scmp.eq.s32.totalorder %s16, 1
      %p76 = scmp.ne.s32.totalorder %s71, %s73
      %p77 = scmp.eq.s32.totalorder %s16, 0
      %p78 = por %p76, %p77
      %p79 = scmp.ne.s32.totalorder %s71, %s73
      %p80 = scmp.eq.s32.totalorder %s21, 1
      %p81 = por %p79, %p80
      %p82 = scmp.ne.s32.totalorder %s73, %s74
      %p83 = scmp.eq.s32.totalorder %s21, 0
      %p84 = por %p82, %p83
      %p85 = scmp.ne.s32.totalorder %s73, %s74
      %p86 = scmp.eq.s32.totalorder %s22, 1
      %p87 = por %p85, %p86
      %p89 = scmp.ne.s32.totalorder %s74, %s88
      %p90 = scmp.eq.s32.totalorder %s22, 0
      %p91 = por %p89, %p90
      %s93 = sadd.s32 %s92, 1
      %p96 = scmp.eq.s32.totalorder %s16, 1
      %p97 = scmp.ne.s32.totalorder %s92, %s94
      %p98 = scmp.eq.s32.totalorder %s16, 0
      %p99 = por %p97, %p98
      %p100 = scmp.ne.s32.totalorder %s92, %s94
      %p101 = scmp.eq.s32.totalorder %s21, 1
      %p102 = por %p100, %p101
      %p103 = scmp.ne.s32.totalorder %s94, %s95
      %p104 = scmp.eq.s32.totalorder %s21, 0
      %p105 = por %p103, %p104
      %p106 = scmp.ne.s32.totalorder %s94, %s95
      %p107 = scmp.eq.s32.totalorder %s22, 1
      %p108 = por %p106, %p107
      %p110 = scmp.ne.s32.totalorder %s95, %s109
      %p111 = scmp.eq.s32.totalorder %s22, 0
      %p112 = por %p110, %p111
      %s114 = sadd.s32 %s113, 1
      %p117 = scmp.eq.s32.totalorder %s16, 1
      %p118 = scmp.ne.s32.totalorder %s113, %s115
      %p119 = scmp.eq.s32.totalorder %s16, 0
      %p120 = por %p118, %p119
      %p121 = scmp.ne.s32.totalorder %s113, %s115
      %p122 = scmp.eq.s32.totalorder %s21, 1
      %p123 = por %p121, %p122
      %p124 = scmp.ne.s32.totalorder %s115, %s116
      %p125 = scmp.eq.s32.totalorder %s21, 0
      %p126 = por %p124, %p125
      %p127 = scmp.ne.s32.totalorder %s115, %s116
      %p128 = scmp.eq.s32.totalorder %s22, 1
      %p129 = por %p127, %p128
      %p131 = scmp.ne.s32.totalorder %s116, %s130
      %p132 = scmp.eq.s32.totalorder %s22, 0
      %p133 = por %p131, %p132
      %s135 = sadd.s32 %s134, 1
      %p138 = scmp.eq.s32.totalorder %s16, 1
      %p139 = scmp.ne.s32.totalorder %s134, %s136
      %p140 = scmp.eq.s32.totalorder %s16, 0
      %p141 = por %p139, %p140
      %p142 = scmp.ne.s32.totalorder %s134, %s136
      %p143 = scmp.eq.s32.totalorder %s21, 1
      %p144 = por %p142, %p143
      %p145 = scmp.ne.s32.totalorder %s136, %s137
      %p146 = scmp.eq.s32.totalorder %s21, 0
      %p147 = por %p145, %p146
      %p148 = scmp.ne.s32.totalorder %s136, %s137
      %p149 = scmp.eq.s32.totalorder %s22, 1
      %p150 = por %p148, %p149
      %p152 = scmp.ne.s32.totalorder %s137, %s151
      %p153 = scmp.eq.s32.totalorder %s22, 0
      %p154 = por %p152, %p153
      %s156 = sadd.s32 %s155, 1
      %p159 = scmp.eq.s32.totalorder %s16, 1
      %p160 = scmp.ne.s32.totalorder %s155, %s157
      %p161 = scmp.eq.s32.totalorder %s16, 0
      %p162 = por %p160, %p161
      %p163 = scmp.ne.s32.totalorder %s155, %s157
      %p164 = scmp.eq.s32.totalorder %s21, 1
      %p165 = por %p163, %p164
      %p166 = scmp.ne.s32.totalorder %s157, %s158
      %p167 = scmp.eq.s32.totalorder %s21, 0
      %p168 = por %p166, %p167
      %p169 = scmp.ne.s32.totalorder %s157, %s158
      %p170 = scmp.eq.s32.totalorder %s22, 1
      %p171 = por %p169, %p170
      %p173 = scmp.ne.s32.totalorder %s158, %s172
      %p174 = scmp.eq.s32.totalorder %s22, 0
      %p175 = por %p173, %p174
      %s176 = ssub.s32 %s16, %s23
      %p177 = scmp.eq.s32.totalorder %s176, 0
      %s179 = sadd.s32 %s178, 1
      %s180 = scalar_select %p177, %s178, %s179
      %p183 = pneg %p177
      %p184 = scmp.eq.s32.totalorder %s16, 1
      %p185 = por %p183, %p184
      %p186 = scmp.ne.s32.totalorder %s178, %s181
      %p187 = scmp.eq.s32.totalorder %s16, 0
      %p188 = por %p186, %p187
      %p189 = scmp.ne.s32.totalorder %s178, %s181
      %p190 = scmp.eq.s32.totalorder %s21, 1
      %p191 = por %p189, %p190
      %p192 = scmp.ne.s32.totalorder %s181, %s182
      %p193 = scmp.eq.s32.totalorder %s21, 0
      %p194 = por %p192, %p193
      %p195 = scmp.ne.s32.totalorder %s181, %s182
      %p196 = scmp.eq.s32.totalorder %s22, 1
      %p197 = por %p195, %p196
      %p199 = scmp.ne.s32.totalorder %s182, %s198
      %p200 = scmp.eq.s32.totalorder %s22, 0
      %p201 = por %p199, %p200
      %p202 = scmp.le.s32.totalorder 1, %s16
      %p203 = scmp.lt.s32.totalorder %s16, 3
      %p204 = pnand %p202, %p203
      %p205 = pneg %p204
      // Predicated region
      $region9: #{tpu_custom_call.1} parent=5 // pred_check
        _
      $region10: #{tpu_custom_call.1} parent=5 // pred_check_branch
        %207 = sbr.rel (%p204) target = $region12
      $region11: #{tpu_custom_call.1} parent=5 // pred_region
        %s208 = ssub.s32 %s16, 1
        // Predicated region
        $region13: #{tpu_custom_call.1} parent=11 // pred_check
          %p209 = pneg %p63
        $region14: #{tpu_custom_call.1} parent=11 // pred_check_branch
          %211 = sbr.rel (%p209) target = $region16
        $region15: #{tpu_custom_call.1} parent=11 // pred_region
          _
        $region16: #{tpu_custom_call.1} parent=11 // pred_fallthru
          _
        // Predicated region
        $region17: #{tpu_custom_call.1} parent=11 // pred_check
          %p212 = pneg %p84
        $region18: #{tpu_custom_call.1} parent=11 // pred_check_branch
          %214 = sbr.rel (%p212) target = $region20
        $region19: #{tpu_custom_call.1} parent=11 // pred_region
          _
        $region20: #{tpu_custom_call.1} parent=11 // pred_fallthru
          _
        // Predicated region
        $region21: #{tpu_custom_call.1} parent=11 // pred_check
          %p215 = pneg %p105
        $region22: #{tpu_custom_call.1} parent=11 // pred_check_branch
          %217 = sbr.rel (%p215) target = $region24
        $region23: #{tpu_custom_call.1} parent=11 // pred_region
          _
        $region24: #{tpu_custom_call.1} parent=11 // pred_fallthru
          _
        // Predicated region
        $region25: #{tpu_custom_call.1} parent=11 // pred_check
          %p218 = pneg %p126
        $region26: #{tpu_custom_call.1} parent=11 // pred_check_branch
          %220 = sbr.rel (%p218) target = $region28
        $region27: #{tpu_custom_call.1} parent=11 // pred_region
          _
        $region28: #{tpu_custom_call.1} parent=11 // pred_fallthru
          _
        // Predicated region
        $region29: #{tpu_custom_call.1} parent=11 // pred_check
          %p221 = pneg %p147
        $region30: #{tpu_custom_call.1} parent=11 // pred_check_branch
          %223 = sbr.rel (%p221) target = $region32
        $region31: #{tpu_custom_call.1} parent=11 // pred_region
          _
        $region32: #{tpu_custom_call.1} parent=11 // pred_fallthru
          _
        // Predicated region
        $region33: #{tpu_custom_call.1} parent=11 // pred_check
          %p224 = pneg %p168
        $region34: #{tpu_custom_call.1} parent=11 // pred_check_branch
          %226 = sbr.rel (%p224) target = $region36
        $region35: #{tpu_custom_call.1} parent=11 // pred_region
          _
        $region36: #{tpu_custom_call.1} parent=11 // pred_fallthru
          _
      $region12: #{tpu_custom_call.1} parent=5 // pred_fallthru
        _
      %p227 = scmp.lt.s32.totalorder %s16, 2
      // Predicated region
      $region37: #{tpu_custom_call.1} parent=5 // pred_check
        %p228 = pneg %p227
      $region38: #{tpu_custom_call.1} parent=5 // pred_check_branch
        %230 = sbr.rel (%p228) target = $region40
      $region39: #{tpu_custom_call.1} parent=5 // pred_region
        // Predicated region
        $region41: #{tpu_custom_call.1} parent=39 // pred_check
          %p231 = pneg %p36
        $region42: #{tpu_custom_call.1} parent=39 // pred_check_branch
          %233 = sbr.rel (%p231) target = $region44
        $region43: #{tpu_custom_call.1} parent=39 // pred_region
          %p234 = scmp.lt.s32.totalorder %s16, 1
          %s235 = scalar_select %p234, %s16, 1
          %s236 = smul.addr %s235, 4
          %s237 = scalar_lea.vmem %s0, %s236
        $region44: #{tpu_custom_call.1} parent=39 // pred_fallthru
          _
      $region40: #{tpu_custom_call.1} parent=5 // pred_fallthru
        _
      %p238 = scmp.le.s32.totalorder 1, %s16
      %p239 = scmp.lt.s32.totalorder %s16, 3
      %p240 = pnand %p238, %p239
      %p241 = pneg %p240
      // Predicated region
      $region45: #{tpu_custom_call.1} parent=5 // pred_check
        _
      $region46: #{tpu_custom_call.1} parent=5 // pred_check_branch
        %243 = sbr.rel (%p240) target = $region48
      $region47: #{tpu_custom_call.1} parent=5 // pred_region
        %s244 = ssub.s32 %s16, 1
        %p245 = scmp.lt.s32.totalorder %s21, 1
        %s246 = scalar_select %p245, %s21, 1
        %s247 = smul.addr %s246, 4
        %s248 = scalar_lea.vmem %s0, %s247
        %p249 = pneg %p42
        %p250 = pneg %p39
        %p251 = pneg %p63
        %p252 = pneg %p60
        %p253 = pneg %p84
        %p254 = pneg %p81
        %p255 = pneg %p105
        %p256 = pneg %p102
        %p257 = pneg %p126
        %p258 = pneg %p123
        %p259 = pneg %p147
        %p260 = pneg %p144
        %p261 = pneg %p168
        %p262 = pneg %p165
        %p263 = pneg %p194
        %p264 = pneg %p191
        %s265 = sand.u32 %s181, 1
        %s266 = scalar_lea.sflag [#allocation5], %s265
        %s267 = sand.u32 %s181, 1
        %s268 = smul.addr %s267, 8
        %s269 = scalar_lea.vmem [#allocation4], %s268
        %p270 = scmp.lt.s32.totalorder %s21, 1
        %s271 = scalar_select %p270, %s21, 1
        %s272 = smul.addr %s271, 4
        %s273 = scalar_lea.vmem %s0, %s272
        %v274 = vld [vmem:[%s273] sm:$0xf]
        %v275 = vmul.f32 %v274, 0.5
        %v276 = vmul.f32 %v274, 0.70710677
        %v277 = verf.f32.pop %v276
        %v278 = vadd.f32 %v277, 1.0
        %v279 = vmul.f32 %v275, %v278
        %v280 = vlaneseq
        %v281 = vand.u32 %v280, 127
        %vm282 = vcmask 1047680
        %283 = vrot.lane.b32.xlu0 %v279, 16
        %v284 = vpop.permute.xlu0 %283
        %v285 = vsel %vm282, %v284, %v279
        %286 = vrot.lane.b32.xlu0 %v285, 16
        %v287 = vpop.permute.xlu0 %286
        %v288 = vsel %vm282, %v287, %v279
        %vm289 = vcmp.ge.s32.totalorder %v281, 2
        %vm290 = vcmp.lt.s32.totalorder %v281, 18
        %vm291 = vmand %vm289, %vm290
        %293 = vrot.lane.b32.xlu0 %v288, 114
        %v294 = vpop.permute.xlu0 %293
        %v296 = vsel %vm291, %v294, 0.0
        %vm297 = vcmask 125952
        %298 = vst.msk [vmem:[#allocation2] sm:$0xf] %vm297, %v296
        %vm299 = vcmp.ge.s32.totalorder %v281, 0
        %vm300 = vcmp.lt.s32.totalorder %v281, 16
        %vm301 = vmand %vm299, %vm300
        %v302 = vsel %vm301, %v279, 0.0
        %303 = vst.msk [vmem:[#allocation2 + $0x4] sm:$0xf] %vm297, %v302
        %vm304 = vcmp.ge.s32.totalorder %v281, 4294967294
        %vm305 = vcmp.lt.s32.totalorder %v281, 14
        %vm306 = vmand %vm304, %vm305
        %307 = vrot.lane.b32.xlu0 %v288, 126
        %v308 = vpop.permute.xlu0 %307
        %v310 = vsel %vm306, %v308, 0.0
        %311 = vst.msk [vmem:[#allocation2 + $0x8] sm:$0xf] %vm297, %v310
        %v312 = vld [vmem:[%s3] sm:$0xff]
        %v313 = vld [vmem:[#allocation2] sm:$0xff]
        %v314 = vld [vmem:[#allocation2 + $0x8] sm:$0xf]
        %v315 = vld [vmem:[%s4] sm:$0xff]
        %317 = vset.pattern.permute.xlu0 0
        %318 = vperm.xlu0 %317, %v315
        %v319 = vpop.permute.xlu0 %318
        %vm321 = vcmask 97280
        %v323 = vsel %vm321, %v312, 0
        %vm325 = vcmask 1043456
        %v327 = vsel %vm325, %v314, 0
        %329 = vmatprep.subr.mxu0 0.0
        %330 = vmatpush1.msra.mxu0 0.0
        %331 = vmatprep.subr.mxu0 0.0
        %332 = vmatpush1.msra.mxu0 0.0
        %333 = vmatprep.subr.mxu0 0.0
        %334 = vmatpush1.msra.mxu0 0.0
        %335 = vmatprep.subr.mxu0 0.0
        %336 = vmatpush1.msra.mxu0 0.0
        %337 = vmatprep.subr.mxu0 0.0
        %338 = vmatpush1.msra.mxu0 0.0
        %339 = vmatprep.subr.mxu0 0.0
        %340 = vmatpush1.msra.mxu0 0.0
        %341 = vmatprep.subr.mxu0 0.0
        %342 = vmatpush1.msra.mxu0 0.0
        %343 = vmatprep.subr.mxu0 0.0
        %344 = vmatpush1.msra.mxu0 0.0
        %345 = vmatprep.subr.mxu0 0.0
        %346 = vmatpush1.msra.mxu0 0.0
        %347 = vmatprep.subr.mxu0 0.0
        %348 = vmatpush1.msra.mxu0 0.0
        %349 = vmatprep.subr.mxu0 0.0
        %350 = vmatpush1.msra.mxu0 0.0
        %351 = vmatprep.subr.mxu0 0.0
        %352 = vmatpush1.msra.mxu0 0.0
        %353 = vmatprep.subr.mxu0 0.0
        %354 = vmatpush1.msra.mxu0 0.0
        %355 = vmatprep.subr.mxu0 0.0
        %356 = vmatpush1.msra.mxu0 0.0
        %357 = vmatprep.subr.mxu0 0.0
        %358 = vmatpush1.msra.mxu0 %v327
        %359 = vmatprep.subr.mxu0 0.0
        %360 = vmatpush1.msra.mxu0 %v313
        %361 = vmatprep.subr.mxu0 0.0
        %362 = vmatpush2.msra.mxu0 0.0
        %363 = vmatprep.subr.mxu0 0.0
        %364 = vmatpush2.msra.mxu0 0.0
        %365 = vmatprep.subr.mxu0 0.0
        %366 = vmatpush2.msra.mxu0 0.0
        %367 = vmatprep.subr.mxu0 0.0
        %368 = vmatpush2.msra.mxu0 0.0
        %369 = vmatprep.subr.mxu0 0.0
        %370 = vmatpush2.msra.mxu0 0.0
        %371 = vmatprep.subr.mxu0 0.0
        %372 = vmatpush2.msra.mxu0 0.0
        %373 = vmatprep.subr.mxu0 0.0
        %374 = vmatpush2.msra.mxu0 0.0
        %375 = vmatprep.subr.mxu0 0.0
        %376 = vmatpush2.msra.mxu0 0.0
        %377 = vmatprep.subr.mxu0 0.0
        %378 = vmatpush2.msra.mxu0 0.0
        %379 = vmatprep.subr.mxu0 0.0
        %380 = vmatpush2.msra.mxu0 0.0
        %381 = vmatprep.subr.mxu0 0.0
        %382 = vmatpush2.msra.mxu0 0.0
        %383 = vmatprep.subr.mxu0 0.0
        %384 = vmatpush2.msra.mxu0 0.0
        %385 = vmatprep.subr.mxu0 0.0
        %386 = vmatpush2.msra.mxu0 0.0
        %387 = vmatprep.subr.mxu0 0.0
        %388 = vmatpush2.msra.mxu0 0.0
        %389 = vmatprep.subr.mxu0 0.0
        %390 = vmatpush2.msra.mxu0 0.0
        %391 = vmatprep.subr.mxu0 0.0
        %392 = vmatpush2.msra.mxu0 0.0
        %393 = vmatprep.mubr.f32.mxu0 0.0
        %394 = vmatmul.mubr.f32.gmra.mxu0 %v323
        %v395 = vpop.f32.mrf.mxu0
        %v396 = vadd.f32 %v319, %v395
        %v397 = vpop.f32.mrf.mxu0
        %398 = vdwg.mxu0
        %v399 = vmul.f32 %v396, 0.5
        %v400 = vmul.f32 %v396, 0.70710677
        %v401 = verf.f32.pop %v400
        %v402 = vadd.f32 %v401, 1.0
        %v403 = vmul.f32 %v399, %v402
        %404 = vrot.lane.b32.xlu0 %v403, 16
        %v405 = vpop.permute.xlu0 %404
        %v406 = vsel %vm282, %v405, %v403
        %407 = vrot.lane.b32.xlu0 %v406, 16
        %v408 = vpop.permute.xlu0 %407
        %v409 = vsel %vm282, %v408, %v403
        %411 = vrot.lane.b32.xlu0 %v409, 114
        %v412 = vpop.permute.xlu0 %411
        %v414 = vsel %vm291, %v412, 0.0
        %vm415 = vcmask 130048
        %416 = vst.msk [vmem:[#allocation3] sm:$0xff] %vm415, %v414
        %v417 = vsel %vm301, %v403, 0.0
        %418 = vst.msk [vmem:[#allocation3 + $0x8] sm:$0xff] %vm415, %v417
        %419 = vrot.lane.b32.xlu0 %v409, 126
        %v420 = vpop.permute.xlu0 %419
        %v422 = vsel %vm306, %v420, 0.0
        %423 = vst.msk [vmem:[#allocation3 + $0x10] sm:$0xff] %vm415, %v422
        %v424 = vld [vmem:[%s5] sm:$0xff]
        %v425 = vld [vmem:[#allocation3] sm:$0xff]
        %v426 = vld [vmem:[#allocation3 + $0x8] sm:$0xff]
        %v427 = vld [vmem:[#allocation3 + $0x10] sm:$0xff]
        %v428 = vld [vmem:[%s6] sm:$0xff]
        %430 = vset.pattern.permute.xlu0 0
        %431 = vperm.xlu0 %430, %v428
        %v432 = vpop.permute.xlu0 %431
        %vm434 = vcmask 195584
        %v436 = vsel %vm434, %v424, 0
        %438 = vmatprep.subr.mxu0 0.0
        %439 = vmatpush1.msra.mxu0 0.0
        %440 = vmatprep.subr.mxu0 0.0
        %441 = vmatpush1.msra.mxu0 0.0
        %442 = vmatprep.subr.mxu0 0.0
        %443 = vmatpush1.msra.mxu0 0.0
        %444 = vmatprep.subr.mxu0 0.0
        %445 = vmatpush1.msra.mxu0 0.0
        %446 = vmatprep.subr.mxu0 0.0
        %447 = vmatpush1.msra.mxu0 0.0
        %448 = vmatprep.subr.mxu0 0.0
        %449 = vmatpush1.msra.mxu0 0.0
        %450 = vmatprep.subr.mxu0 0.0
        %451 = vmatpush1.msra.mxu0 0.0
        %452 = vmatprep.subr.mxu0 0.0
        %453 = vmatpush1.msra.mxu0 0.0
        %454 = vmatprep.subr.mxu0 0.0
        %455 = vmatpush1.msra.mxu0 0.0
        %456 = vmatprep.subr.mxu0 0.0
        %457 = vmatpush1.msra.mxu0 0.0
        %458 = vmatprep.subr.mxu0 0.0
        %459 = vmatpush1.msra.mxu0 0.0
        %460 = vmatprep.subr.mxu0 0.0
        %461 = vmatpush1.msra.mxu0 0.0
        %462 = vmatprep.subr.mxu0 0.0
        %463 = vmatpush1.msra.mxu0 0.0
        %464 = vmatprep.subr.mxu0 0.0
        %465 = vmatpush1.msra.mxu0 %v427
        %466 = vmatprep.subr.mxu0 0.0
        %467 = vmatpush1.msra.mxu0 %v426
        %468 = vmatprep.subr.mxu0 0.0
        %469 = vmatpush1.msra.mxu0 %v425
        %470 = vmatprep.subr.mxu0 0.0
        %471 = vmatpush2.msra.mxu0 0.0
        %472 = vmatprep.subr.mxu0 0.0
        %473 = vmatpush2.msra.mxu0 0.0
        %474 = vmatprep.subr.mxu0 0.0
        %475 = vmatpush2.msra.mxu0 0.0
        %476 = vmatprep.subr.mxu0 0.0
        %477 = vmatpush2.msra.mxu0 0.0
        %478 = vmatprep.subr.mxu0 0.0
        %479 = vmatpush2.msra.mxu0 0.0
        %480 = vmatprep.subr.mxu0 0.0
        %481 = vmatpush2.msra.mxu0 0.0
        %482 = vmatprep.subr.mxu0 0.0
        %483 = vmatpush2.msra.mxu0 0.0
        %484 = vmatprep.subr.mxu0 0.0
        %485 = vmatpush2.msra.mxu0 0.0
        %486 = vmatprep.subr.mxu0 0.0
        %487 = vmatpush2.msra.mxu0 0.0
        %488 = vmatprep.subr.mxu0 0.0
        %489 = vmatpush2.msra.mxu0 0.0
        %490 = vmatprep.subr.mxu0 0.0
        %491 = vmatpush2.msra.mxu0 0.0
        %492 = vmatprep.subr.mxu0 0.0
        %493 = vmatpush2.msra.mxu0 0.0
        %494 = vmatprep.subr.mxu0 0.0
        %495 = vmatpush2.msra.mxu0 0.0
        %496 = vmatprep.subr.mxu0 0.0
        %497 = vmatpush2.msra.mxu0 0.0
        %498 = vmatprep.subr.mxu0 0.0
        %499 = vmatpush2.msra.mxu0 0.0
        %500 = vmatprep.subr.mxu0 0.0
        %501 = vmatpush2.msra.mxu0 0.0
        %502 = vmatprep.mubr.f32.mxu0 0.0
        %503 = vmatmul.mubr.f32.gmra.mxu0 %v436
        %v504 = vpop.f32.mrf.mxu0
        %v505 = vadd.f32 %v432, %v504
        %v506 = vpop.f32.mrf.mxu0
        %507 = vdwg.mxu0
        %v508 = vld [vmem:[%s1] sm:$0xff]
        %v509 = vld [vmem:[%s273] sm:$0xf]
        %v510 = vld [vmem:[%s2] sm:$0xff]
        %512 = vset.pattern.permute.xlu0 0
        %513 = vperm.xlu0 %512, %v510
        %v514 = vpop.permute.xlu0 %513
        %vm516 = vcmask 31744
        %v518 = vsel %vm516, %v508, 0
        %v521 = vsel %vm325, %v509, 0
        %523 = vmatprep.subr.mxu0 0.0
        %524 = vmatpush1.msra.mxu0 0.0
        %525 = vmatprep.subr.mxu0 0.0
        %526 = vmatpush1.msra.mxu0 0.0
        %527 = vmatprep.subr.mxu0 0.0
        %528 = vmatpush1.msra.mxu0 0.0
        %529 = vmatprep.subr.mxu0 0.0
        %530 = vmatpush1.msra.mxu0 0.0
        %531 = vmatprep.subr.mxu0 0.0
        %532 = vmatpush1.msra.mxu0 0.0
        %533 = vmatprep.subr.mxu0 0.0
        %534 = vmatpush1.msra.mxu0 0.0
        %535 = vmatprep.subr.mxu0 0.0
        %536 = vmatpush1.msra.mxu0 0.0
        %537 = vmatprep.subr.mxu0 0.0
        %538 = vmatpush1.msra.mxu0 0.0
        %539 = vmatprep.subr.mxu0 0.0
        %540 = vmatpush1.msra.mxu0 0.0
        %541 = vmatprep.subr.mxu0 0.0
        %542 = vmatpush1.msra.mxu0 0.0
        %543 = vmatprep.subr.mxu0 0.0
        %544 = vmatpush1.msra.mxu0 0.0
        %545 = vmatprep.subr.mxu0 0.0
        %546 = vmatpush1.msra.mxu0 0.0
        %547 = vmatprep.subr.mxu0 0.0
        %548 = vmatpush1.msra.mxu0 0.0
        %549 = vmatprep.subr.mxu0 0.0
        %550 = vmatpush1.msra.mxu0 0.0
        %551 = vmatprep.subr.mxu0 0.0
        %552 = vmatpush1.msra.mxu0 0.0
        %553 = vmatprep.subr.mxu0 0.0
        %554 = vmatpush1.msra.mxu0 %v521
        %555 = vmatprep.subr.mxu0 0.0
        %556 = vmatpush2.msra.mxu0 0.0
        %557 = vmatprep.subr.mxu0 0.0
        %558 = vmatpush2.msra.mxu0 0.0
        %559 = vmatprep.subr.mxu0 0.0
        %560 = vmatpush2.msra.mxu0 0.0
        %561 = vmatprep.subr.mxu0 0.0
        %562 = vmatpush2.msra.mxu0 0.0
        %563 = vmatprep.subr.mxu0 0.0
        %564 = vmatpush2.msra.mxu0 0.0
        %565 = vmatprep.subr.mxu0 0.0
        %566 = vmatpush2.msra.mxu0 0.0
        %567 = vmatprep.subr.mxu0 0.0
        %568 = vmatpush2.msra.mxu0 0.0
        %569 = vmatprep.subr.mxu0 0.0
        %570 = vmatpush2.msra.mxu0 0.0
        %571 = vmatprep.subr.mxu0 0.0
        %572 = vmatpush2.msra.mxu0 0.0
        %573 = vmatprep.subr.mxu0 0.0
        %574 = vmatpush2.msra.mxu0 0.0
        %575 = vmatprep.subr.mxu0 0.0
        %576 = vmatpush2.msra.mxu0 0.0
        %577 = vmatprep.subr.mxu0 0.0
        %578 = vmatpush2.msra.mxu0 0.0
        %579 = vmatprep.subr.mxu0 0.0
        %580 = vmatpush2.msra.mxu0 0.0
        %581 = vmatprep.subr.mxu0 0.0
        %582 = vmatpush2.msra.mxu0 0.0
        %583 = vmatprep.subr.mxu0 0.0
        %584 = vmatpush2.msra.mxu0 0.0
        %585 = vmatprep.subr.mxu0 0.0
        %586 = vmatpush2.msra.mxu0 0.0
        %587 = vmatprep.mubr.f32.mxu0 0.0
        %588 = vmatmul.mubr.f32.gmra.mxu0 %v518
        %v589 = vpop.f32.mrf.mxu0
        %v590 = vadd.f32 %v514, %v589
        %v591 = vpop.f32.mrf.mxu0
        %592 = vdwg.mxu0
        %v593 = vadd.f32 %v505, %v590
        %594 = vst.msk [vmem:[%s269] sm:$0xff] %vm415, %v593
        %s595 = sand.u32 %s181, 1
        %s596 = scalar_lea.sflag [#allocation5], %s595
        %s597 = sand.u32 %s181, 1
        %s598 = smul.addr %s597, 8
        %s599 = scalar_lea.vmem [#allocation4], %s598
        // Predicated region
        $region49: #{tpu_custom_call.1} parent=47 // pred_check
          %p600 = pneg %p191
        $region50: #{tpu_custom_call.1} parent=47 // pred_check_branch
          %602 = sbr.rel (%p600) target = $region52
        $region51: #{tpu_custom_call.1} parent=47 // pred_region
          %s604 = ssub.s32 128, 128
          %605 = vsyncadd %s596, %s604
          %s606 = smul.addr %s21, 128
          %s607 = scalar_lea.hbm %s7, %s606
          %s609 = sshll.u32 %s599, 4
          %s610 = int_to_ptr.vmem [resolvable:$true] %s609
          %612 = dma.vmem_to_hbm [thread:$0]  %s610, 128, %s607, %s596
        $region52: #{tpu_custom_call.1} parent=47 // pred_fallthru
          _
      $region48: #{tpu_custom_call.1} parent=5 // pred_fallthru
        _
      %p613 = scmp.le.s32.totalorder 2, %s16
      // Predicated region
      $region53: #{tpu_custom_call.1} parent=5 // pred_check
        %p614 = pneg %p613
      $region54: #{tpu_custom_call.1} parent=5 // pred_check_branch
        %616 = sbr.rel (%p614) target = $region56
      $region55: #{tpu_custom_call.1} parent=5 // pred_region
        %s617 = ssub.s32 %s16, 2
        // Predicated region
        $region57: #{tpu_custom_call.1} parent=55 // pred_check
          %p618 = pneg %p197
        $region58: #{tpu_custom_call.1} parent=55 // pred_check_branch
          %620 = sbr.rel (%p618) target = $region60
        $region59: #{tpu_custom_call.1} parent=55 // pred_region
          %s621 = sand.u32 %s182, 1
          %s622 = scalar_lea.sflag [#allocation5], %s621
          %s623 = sand.u32 %s182, 1
          %s624 = smul.addr %s623, 8
          %s625 = scalar_lea.vmem [#allocation4], %s624
          %626 = dma.done %s622, 128
        $region60: #{tpu_custom_call.1} parent=55 // pred_fallthru
          _
      $region56: #{tpu_custom_call.1} parent=5 // pred_fallthru
        _
    $region6: #{tpu_custom_call.1} parent=1 // loop_footer
      %s20 = sadd.s32 1, %s16
    $region7: #{tpu_custom_call.1} parent=1 // loop_footer_branch
      %15 = sbr.rel target = $region3
    $region8: #{tpu_custom_call.1} parent=1 // loop_exit
      _
    %627 = vsyncpa [#allocation5], 1
    %s628 = scalar_lea.sflag [#allocation5], 1
    %629 = vsyncpa %s628, 1

</llo_original>
